<compile_context>
chip_gen: v7x
topology: tpu7x:2x2x1
jax: 0.10.0
libtpu: 0.0.40
codegen_flags: <defaults>
</compile_context>

<pallas_src>
import functools

import jax
import jax.numpy as jnp
from jax.experimental import pallas as pl
from jax.experimental.pallas import tpu as pltpu


def _round_up(x, m):
    return ((x + m - 1) // m) * m


# ----------------------------- Pallas kernel ------------------------------ #
def centralv_kernel(xt_ref, w1t_ref, b1_ref, w2t_ref, b2_ref, w3_ref, b3_ref,
                    o_ref):
    # xt_ref : (Fp, R)   bf16  -- R rows live on the lane axis
    # w1t_ref: (Hp, Fp)  bf16   (resident)
    # b1_ref : (Hp, 1)   f32
    # w2t_ref: (Hp, Hp)  bf16   (resident)
    # b2_ref : (Hp, 1)   f32
    # w3_ref : (Hp, 1)   f32
    # b3_ref : (1, 1)    f32
    # o_ref  : (1, 1, R) f32   -- lane-dense value row
    h1 = jnp.dot(w1t_ref[...], xt_ref[...],
                 preferred_element_type=jnp.float32)
    h1 = jnp.maximum(h1 + b1_ref[...], 0.0)
    h2 = jnp.dot(w2t_ref[...], h1.astype(w2t_ref.dtype),
                 preferred_element_type=jnp.float32)
    h2 = jnp.maximum(h2 + b2_ref[...], 0.0)
    # fc3: (H -> 1) as VPU multiply + sublane (XLU) reduce.  A (H,1) MXU
    # matmul would waste a full MXU pass for a 1-lane result.
    q = jnp.sum(h2 * w3_ref[...], axis=0, keepdims=True) + b3_ref[...]
    o_ref[...] = q.reshape(o_ref.shape)


@functools.partial(jax.jit, static_argnames=("block_rows",))
def centralv_mlp(x, w1, b1, w2, b2, w3, b3, *, block_rows=512):
    """x: (N, F) f32 -> (N, 1) f32 via fc1 -> relu -> fc2 -> relu -> fc3."""
    N, F = x.shape
    H = w1.shape[1]

    # Zero-pad hidden width to a full 128-lane vreg width (exactness: ReLU(0)=0,
    # zero rows/cols contribute nothing) and feature dim to bf16 sublane tile.
    Hp = _round_up(H, 128)
    Fp = _round_up(F, 16)

    # Lane-dense row tiling: multiples of 128; clamp so small batches run as a
    # single grid step (each grid step costs ~0.35us of pipeline overhead).
    block_rows = max(128, _round_up(block_rows, 128))
    block_rows = min(block_rows, _round_up(N, 128))
    Np = _round_up(N, block_rows)
    num_blocks = Np // block_rows
    # TODO(synk): on v7x (2 TCs) prefer an even num_blocks for megacore balance.

    # --- layout plumbing: transpose + zero-pad + bf16 cast (pure XLA) ---
    xt = jnp.zeros((Fp, Np), jnp.bfloat16).at[:F, :N].set(
        x.T.astype(jnp.bfloat16))
    w1t = jnp.zeros((Hp, Fp), jnp.bfloat16).at[:H, :F].set(
        w1.T.astype(jnp.bfloat16))
    w2t = jnp.zeros((Hp, Hp), jnp.bfloat16).at[:H, :H].set(
        w2.T.astype(jnp.bfloat16))
    b1p = jnp.zeros((Hp, 1), jnp.float32).at[:H, 0].set(
        b1.reshape(-1).astype(jnp.float32))
    b2p = jnp.zeros((Hp, 1), jnp.float32).at[:H, 0].set(
        b2.reshape(-1).astype(jnp.float32))
    w3p = jnp.zeros((Hp, 1), jnp.float32).at[:H, :].set(w3.astype(jnp.float32))
    b3p = b3.reshape(1, 1).astype(jnp.float32)

    out = pl.pallas_call(
        centralv_kernel,
        out_shape=jax.ShapeDtypeStruct((num_blocks, 1, block_rows),
                                       jnp.float32),
        grid=(num_blocks,),
        in_specs=[
            pl.BlockSpec((Fp, block_rows), lambda i: (0, i)),  # x.T row tile
            pl.BlockSpec((Hp, Fp), lambda i: (0, 0)),          # w1.T (resident)
            pl.BlockSpec((Hp, 1), lambda i: (0, 0)),           # b1
            pl.BlockSpec((Hp, Hp), lambda i: (0, 0)),          # w2.T (resident)
            pl.BlockSpec((Hp, 1), lambda i: (0, 0)),           # b2
            pl.BlockSpec((Hp, 1), lambda i: (0, 0)),           # w3
            pl.BlockSpec((1, 1), lambda i: (0, 0)),            # b3
        ],
        out_specs=pl.BlockSpec((1, 1, block_rows), lambda i: (i, 0, 0)),
        compiler_params=pltpu.CompilerParams(
            dimension_semantics=("parallel",)),
    )(xt, w1t, b1p, w2t, b2p, w3p, b3p)

    # (num_blocks, 1, block_rows) -> (Np,) -> (N, 1); padded rows discarded.
    return out.reshape(Np)[:N].reshape(N, 1)


# ------------------------- _build_inputs (JAX glue) ------------------------ #
def build_inputs(state, obs, actions_onehot, n_agents):
    """Replicates CentralVCritic._build_inputs for t=None.

    state:          (bs, T, state_dim)
    obs:            (bs, T, n_agents, obs_dim)
    actions_onehot: (bs, T, n_agents, n_actions)
    returns:        (bs, T, n_agents, input_shape) float32
    """
    bs, T, _ = state.shape
    parts = []
    # state repeated per agent
    parts.append(jnp.broadcast_to(state[:, :, None, :],
                                  (bs, T, n_agents, state.shape[-1])))
    # flattened joint obs repeated per agent (obs_individual_obs=True)
    obs_flat = obs.reshape(bs, T, -1)
    parts.append(jnp.broadcast_to(obs_flat[:, :, None, :],
                                  (bs, T, n_agents, obs_flat.shape[-1])))
    # last joint actions, shifted by one timestep (obs_last_action=True)
    zeros0 = jnp.zeros_like(actions_onehot[:, 0:1])
    last_actions = jnp.concatenate([zeros0, actions_onehot[:, :-1]], axis=1)
    last_actions = last_actions.reshape(bs, T, 1, -1)
    parts.append(jnp.broadcast_to(last_actions,
                                  (bs, T, n_agents, last_actions.shape[-1])))
    # agent id one-hot
    eye = jnp.eye(n_agents, dtype=state.dtype)
    parts.append(jnp.broadcast_to(eye[None, None], (bs, T, n_agents, n_agents)))
    return jnp.concatenate(parts, axis=-1)


# --------------------------------- Driver ---------------------------------- #
def main():
    # Small synthetic configuration (implied by the module's __init__).
    bs, T = 2, 8
    n_agents = 3
    n_actions = 5
    state_dim = 16
    obs_dim = 10
    hidden_dim = 32
    # input_shape = state + obs*n_agents + n_actions*n_agents + n_agents
    input_shape = state_dim + obs_dim * n_agents + n_actions * n_agents + n_agents  # 64

    key = jax.random.PRNGKey(0)
    ks = jax.random.split(key, 9)

    # Deterministic PyTorch-Linear-style init: U(-1/sqrt(fan_in), 1/sqrt(fan_in))
    def linear_init(kw, kb, fan_in, fan_out):
        bound = 1.0 / jnp.sqrt(jnp.float32(fan_in))
        w = jax.random.uniform(kw, (fan_in, fan_out), jnp.float32, -bound, bound)
        b = jax.random.uniform(kb, (1, fan_out), jnp.float32, -bound, bound)
        return w, b

    w1, b1 = linear_init(ks[0], ks[1], input_shape, hidden_dim)
    w2, b2 = linear_init(ks[2], ks[3], hidden_dim, hidden_dim)
    w3, b3 = linear_init(ks[4], ks[5], hidden_dim, 1)

    # Synthetic batch tensors.
    state = jax.random.normal(ks[6], (bs, T, state_dim), jnp.float32)
    obs = jax.random.normal(ks[7], (bs, T, n_agents, obs_dim), jnp.float32)
    act_idx = jax.random.randint(ks[8], (bs, T, n_agents), 0, n_actions)
    actions_onehot = jax.nn.one_hot(act_idx, n_actions, dtype=jnp.float32)

    # Build critic inputs (glue) and flatten rows for the kernel.
    inputs = build_inputs(state, obs, actions_onehot, n_agents)  # (bs,T,A,F)
    N = bs * T * n_agents                                         # 48 rows
    x_flat = inputs.reshape(N, input_shape)

    q_flat = centralv_mlp(x_flat, w1, b1, w2, b2, w3, b3)
    q = q_flat.reshape(bs, T, n_agents, 1)
    jax.block_until_ready(q)

    # Cross-check against plain-JAX f32 reference (bf16 MXU operands -> use a
    # modestly relaxed tolerance; f32 accumulation keeps the error small).
    h1 = jax.nn.relu(x_flat @ w1 + b1)
    h2 = jax.nn.relu(h1 @ w2 + b2)
    q_ref = (h2 @ w3 + b3).reshape(bs, T, n_agents, 1)
    assert jnp.allclose(q, q_ref, atol=2e-2, rtol=2e-2), (
        float(jnp.max(jnp.abs(q - q_ref))))

    print("KERNEL_OK")


if __name__ == "__main__":
    main()
</pallas_src>

<mosaic_0001>
module attributes {stable_mosaic.version = 11 : i64} {
  func.func @centralv_kernel(%arg0: i32, %arg1: memref<64x128xbf16, #tpu.memory_space<vmem>>, %arg2: memref<128x64xbf16, #tpu.memory_space<vmem>>, %arg3: memref<128x1xf32, #tpu.memory_space<vmem>>, %arg4: memref<128x128xbf16, #tpu.memory_space<vmem>>, %arg5: memref<128x1xf32, #tpu.memory_space<vmem>>, %arg6: memref<128x1xf32, #tpu.memory_space<vmem>>, %arg7: memref<1x1xf32, #tpu.memory_space<vmem>>, %arg8: memref<1x1x128xf32, #tpu.memory_space<vmem>>) attributes {dimension_semantics = [#tpu.dimension_semantics<parallel>], iteration_bounds = array<i64: 1>, scalar_prefetch = 0 : i64, scratch_operands = 0 : i64, tpu.core_type = #tpu.core_type<tc>, window_params = [{transform_indices = @transform_0, window_bounds = array<i64: 64, 128>}, {pipeline_mode = #tpu.pipeline_mode<synchronous>, transform_indices = @transform_1, window_bounds = array<i64: 128, 64>}, {pipeline_mode = #tpu.pipeline_mode<synchronous>, transform_indices = @transform_2, window_bounds = array<i64: 128, 1>}, {pipeline_mode = #tpu.pipeline_mode<synchronous>, transform_indices = @transform_3, window_bounds = array<i64: 128, 128>}, {pipeline_mode = #tpu.pipeline_mode<synchronous>, transform_indices = @transform_4, window_bounds = array<i64: 128, 1>}, {pipeline_mode = #tpu.pipeline_mode<synchronous>, transform_indices = @transform_5, window_bounds = array<i64: 128, 1>}, {pipeline_mode = #tpu.pipeline_mode<synchronous>, transform_indices = @transform_6, window_bounds = array<i64: 1, 1>}, {transform_indices = @transform_7, window_bounds = array<i64: 1, 1, 128>}]} {
    %c0 = arith.constant 0 : index
    %c0_0 = arith.constant 0 : index
    %0 = vector.load %arg2[%c0, %c0_0] : memref<128x64xbf16, #tpu.memory_space<vmem>>, vector<128x64xbf16>
    %c0_1 = arith.constant 0 : index
    %c0_2 = arith.constant 0 : index
    %1 = vector.load %arg1[%c0_1, %c0_2] : memref<64x128xbf16, #tpu.memory_space<vmem>>, vector<64x128xbf16>
    %cst = arith.constant dense<0.000000e+00> : vector<128x128xf32>
    %2 = tpu.matmul %0, %1, %cst {dimension_numbers = #tpu.dot_dimension_numbers<[1], [0], [0], [1], [0, 0, 1, 1], [], []>} : vector<128x64xbf16>, vector<64x128xbf16>, vector<128x128xf32> -> vector<128x128xf32>
    %c0_3 = arith.constant 0 : index
    %c0_4 = arith.constant 0 : index
    %3 = vector.load %arg3[%c0_3, %c0_4] : memref<128x1xf32, #tpu.memory_space<vmem>>, vector<128x1xf32>
    %4 = vector.broadcast %3 : vector<128x1xf32> to vector<128x128xf32>
    %5 = arith.addf %2, %4 : vector<128x128xf32>
    %cst_5 = arith.constant 0.000000e+00 : f32
    %6 = vector.broadcast %cst_5 : f32 to vector<128x128xf32>
    %7 = arith.maximumf %5, %6 : vector<128x128xf32>
    %c0_6 = arith.constant 0 : index
    %c0_7 = arith.constant 0 : index
    %8 = vector.load %arg4[%c0_6, %c0_7] : memref<128x128xbf16, #tpu.memory_space<vmem>>, vector<128x128xbf16>
    %9 = arith.truncf %7 : vector<128x128xf32> to vector<128x128xbf16>
    %cst_8 = arith.constant dense<0.000000e+00> : vector<128x128xf32>
    %10 = tpu.matmul %8, %9, %cst_8 {dimension_numbers = #tpu.dot_dimension_numbers<[1], [0], [0], [1], [0, 0, 1, 1], [], []>} : vector<128x128xbf16>, vector<128x128xbf16>, vector<128x128xf32> -> vector<128x128xf32>
    %c0_9 = arith.constant 0 : index
    %c0_10 = arith.constant 0 : index
    %11 = vector.load %arg5[%c0_9, %c0_10] : memref<128x1xf32, #tpu.memory_space<vmem>>, vector<128x1xf32>
    %12 = vector.broadcast %11 : vector<128x1xf32> to vector<128x128xf32>
    %13 = arith.addf %10, %12 : vector<128x128xf32>
    %cst_11 = arith.constant 0.000000e+00 : f32
    %14 = vector.broadcast %cst_11 : f32 to vector<128x128xf32>
    %15 = arith.maximumf %13, %14 : vector<128x128xf32>
    %c0_12 = arith.constant 0 : index
    %c0_13 = arith.constant 0 : index
    %16 = vector.load %arg6[%c0_12, %c0_13] : memref<128x1xf32, #tpu.memory_space<vmem>>, vector<128x1xf32>
    %17 = vector.broadcast %16 : vector<128x1xf32> to vector<128x128xf32>
    %18 = arith.mulf %15, %17 : vector<128x128xf32>
    %cst_14 = arith.constant dense<0.000000e+00> : vector<128xf32>
    %19 = vector.multi_reduction <add>, %18, %cst_14 [0] : vector<128x128xf32> to vector<128xf32>
    %20 = vector.shape_cast %19 : vector<128xf32> to vector<1x128xf32>
    %c0_15 = arith.constant 0 : index
    %c0_16 = arith.constant 0 : index
    %21 = vector.load %arg7[%c0_15, %c0_16] : memref<1x1xf32, #tpu.memory_space<vmem>>, vector<1x1xf32>
    %22 = vector.broadcast %21 : vector<1x1xf32> to vector<1x128xf32>
    %23 = arith.addf %20, %22 : vector<1x128xf32>
    %24 = vector.shape_cast %23 : vector<1x128xf32> to vector<1x1x128xf32>
    %c0_17 = arith.constant 0 : index
    %c0_18 = arith.constant 0 : index
    %c0_19 = arith.constant 0 : index
    %25 = vector.load %arg8[%c0_17, %c0_18, %c0_19] : memref<1x1x128xf32, #tpu.memory_space<vmem>>, vector<1x1x128xf32>
    tpu.vector_store %arg8[%c0_17, %c0_18, %c0_19], %24 {strides = array<i32>} : memref<1x1x128xf32, #tpu.memory_space<vmem>>, vector<1x1x128xf32>,
    return
  }
  func.func @transform_0(%arg0: i32) -> (i32, i32) {
    %c0_i32 = arith.constant 0 : i32
    %c0_i32_0 = arith.constant 0 : i32
    return %c0_i32, %arg0 : i32, i32
  }
  func.func @transform_1(%arg0: i32) -> (i32, i32) {
    %c0_i32 = arith.constant 0 : i32
    %c0_i32_0 = arith.constant 0 : i32
    %c0_i32_1 = arith.constant 0 : i32
    return %c0_i32, %c0_i32_0 : i32, i32
  }
  func.func @transform_2(%arg0: i32) -> (i32, i32) {
    %c0_i32 = arith.constant 0 : i32
    %c0_i32_0 = arith.constant 0 : i32
    %c0_i32_1 = arith.constant 0 : i32
    return %c0_i32, %c0_i32_0 : i32, i32
  }
  func.func @transform_3(%arg0: i32) -> (i32, i32) {
    %c0_i32 = arith.constant 0 : i32
    %c0_i32_0 = arith.constant 0 : i32
    %c0_i32_1 = arith.constant 0 : i32
    return %c0_i32, %c0_i32_0 : i32, i32
  }
  func.func @transform_4(%arg0: i32) -> (i32, i32) {
    %c0_i32 = arith.constant 0 : i32
    %c0_i32_0 = arith.constant 0 : i32
    %c0_i32_1 = arith.constant 0 : i32
    return %c0_i32, %c0_i32_0 : i32, i32
  }
  func.func @transform_5(%arg0: i32) -> (i32, i32) {
    %c0_i32 = arith.constant 0 : i32
    %c0_i32_0 = arith.constant 0 : i32
    %c0_i32_1 = arith.constant 0 : i32
    return %c0_i32, %c0_i32_0 : i32, i32
  }
  func.func @transform_6(%arg0: i32) -> (i32, i32) {
    %c0_i32 = arith.constant 0 : i32
    %c0_i32_0 = arith.constant 0 : i32
    %c0_i32_1 = arith.constant 0 : i32
    return %c0_i32, %c0_i32_0 : i32, i32
  }
  func.func @transform_7(%arg0: i32) -> (i32, i32, i32) {
    %c0_i32 = arith.constant 0 : i32
    %c0_i32_0 = arith.constant 0 : i32
    %c0_i32_1 = arith.constant 0 : i32
    return %arg0, %c0_i32, %c0_i32_0 : i32, i32, i32
  }
}

</mosaic_0001>

<llo_original>
// kernel: centralv_mlp.1
$region0: #{centralv_mlp.1}
  #allocation0 [shape = 'u32[]', space=smem, size = 0x4, offset = 0x4, fixed_abs, tag = 'smem constant byte address 0x4 - core index']
  #allocation1 [shape = 'u32[144,128]{1,0:T(1,128)}', space=vmem, size = 0x12000, scoped, tag = 'internal scratch']
  #allocation2 [shape = 'f32[1,1]{1,0:T(1,128)S(1)}', space=vmem, size = 0x200, scoped, tag = 'scoped memory for centralv_mlp.1']
  %s0 = inlined_call_operand.vmem [shape: bf16[64,128], index: 0, kind: input, shape index: {}]
  %s1 = inlined_call_operand.vmem [shape: bf16[128,64], index: 1, kind: input, shape index: {}]
  %s2 = inlined_call_operand.vmem [shape: f32[128,1], index: 2, kind: input, shape index: {}]
  %s3 = inlined_call_operand.vmem [shape: bf16[128,128], index: 3, kind: input, shape index: {}]
  %s4 = inlined_call_operand.vmem [shape: f32[128,1], index: 4, kind: input, shape index: {}]
  %s5 = inlined_call_operand.vmem [shape: f32[128,1], index: 5, kind: input, shape index: {}]
  %s6 = inlined_call_operand.<no memory space> [shape: f32[1,1], index: 6, kind: input, shape index: {}]
  %s7 = inlined_call_operand.vmem [shape: f32[1,1,128], index: 7, kind: output, shape index: {}]
  %s8 = sld [smem:[#allocation0]]
  $region38: #{centralv_mlp.1} parent=0
    _
  %s10 = ssub.s32 1, %s8
  %s11 = scalar_select 0, %s10, %s8
  %v12 = vstv %s6
  %13 = vst [vmem:[#allocation2] sm:$0x1] %v12
  // Predicated region
  $region2: #{centralv_mlp.1} parent=0 // pred_check
    _
  $region3: #{centralv_mlp.1} parent=0 // pred_check_branch
    %15 = sbr.rel (0) target = $region5
  $region4: #{centralv_mlp.1} parent=0 // pred_region
    _
  $region5: #{centralv_mlp.1} parent=0 // pred_fallthru
    _
  // Predicated region
  $region6: #{centralv_mlp.1} parent=0 // pred_check
    _
  $region7: #{centralv_mlp.1} parent=0 // pred_check_branch
    %17 = sbr.rel (0) target = $region9
  $region8: #{centralv_mlp.1} parent=0 // pred_region
    _
  $region9: #{centralv_mlp.1} parent=0 // pred_fallthru
    _
  // Predicated region
  $region10: #{centralv_mlp.1} parent=0 // pred_check
    _
  $region11: #{centralv_mlp.1} parent=0 // pred_check_branch
    %19 = sbr.rel (0) target = $region13
  $region12: #{centralv_mlp.1} parent=0 // pred_region
    _
  $region13: #{centralv_mlp.1} parent=0 // pred_fallthru
    _
  // Predicated region
  $region14: #{centralv_mlp.1} parent=0 // pred_check
    _
  $region15: #{centralv_mlp.1} parent=0 // pred_check_branch
    %21 = sbr.rel (0) target = $region17
  $region16: #{centralv_mlp.1} parent=0 // pred_region
    _
  $region17: #{centralv_mlp.1} parent=0 // pred_fallthru
    _
  // Predicated region
  $region18: #{centralv_mlp.1} parent=0 // pred_check
    _
  $region19: #{centralv_mlp.1} parent=0 // pred_check_branch
    %23 = sbr.rel (0) target = $region21
  $region20: #{centralv_mlp.1} parent=0 // pred_region
    _
  $region21: #{centralv_mlp.1} parent=0 // pred_fallthru
    _
  // Predicated region
  $region22: #{centralv_mlp.1} parent=0 // pred_check
    _
  $region23: #{centralv_mlp.1} parent=0 // pred_check_branch
    %25 = sbr.rel (0) target = $region25
  $region24: #{centralv_mlp.1} parent=0 // pred_region
    _
  $region25: #{centralv_mlp.1} parent=0 // pred_fallthru
    _
  // Predicated region
  $region26: #{centralv_mlp.1} parent=0 // pred_check
    _
  $region27: #{centralv_mlp.1} parent=0 // pred_check_branch
    %27 = sbr.rel (0) target = $region29
  $region28: #{centralv_mlp.1} parent=0 // pred_region
    _
  $region29: #{centralv_mlp.1} parent=0 // pred_fallthru
    _
  %v29 = vld [vmem:[%s1] sm:$0xf]
  %v30 = vld [vmem:[%s1 + $0x4] sm:$0xf]
  %v31 = vld [vmem:[%s1 + $0x8] sm:$0xf]
  %v32 = vld [vmem:[%s1 + $0xc] sm:$0xf]
  %v33 = vld [vmem:[%s1 + $0x10] sm:$0xf]
  %v34 = vld [vmem:[%s1 + $0x14] sm:$0xf]
  %v35 = vld [vmem:[%s1 + $0x18] sm:$0xf]
  %v36 = vld [vmem:[%s1 + $0x1c] sm:$0xf]
  %v37 = vld [vmem:[%s1 + $0x20] sm:$0xf]
  %v38 = vld [vmem:[%s1 + $0x24] sm:$0xf]
  %v39 = vld [vmem:[%s1 + $0x28] sm:$0xf]
  %v40 = vld [vmem:[%s1 + $0x2c] sm:$0xf]
  %v41 = vld [vmem:[%s1 + $0x30] sm:$0xf]
  %v42 = vld [vmem:[%s1 + $0x34] sm:$0xf]
  %v43 = vld [vmem:[%s1 + $0x38] sm:$0xf]
  %v44 = vld [vmem:[%s1 + $0x3c] sm:$0xf]
  %v45 = vld [vmem:[%s0] sm:$0xf]
  %v46 = vld [vmem:[%s0 + $0x4] sm:$0xf]
  %v47 = vld [vmem:[%s0 + $0x8] sm:$0xf]
  %v48 = vld [vmem:[%s0 + $0xc] sm:$0xf]
  %v49 = vld [vmem:[%s0 + $0x10] sm:$0xf]
  %v50 = vld [vmem:[%s0 + $0x14] sm:$0xf]
  %v51 = vld [vmem:[%s0 + $0x18] sm:$0xf]
  %v52 = vld [vmem:[%s0 + $0x1c] sm:$0xf]
  %v53 = vld [vmem:[%s2] sm:$0xff]
  %v54 = vld [vmem:[%s2 + $0x8] sm:$0xff]
  %v55 = vld [vmem:[%s2 + $0x10] sm:$0xff]
  %v56 = vld [vmem:[%s2 + $0x18] sm:$0xff]
  %v57 = vld [vmem:[%s2 + $0x20] sm:$0xff]
  %v58 = vld [vmem:[%s2 + $0x28] sm:$0xff]
  %v59 = vld [vmem:[%s2 + $0x30] sm:$0xff]
  %v60 = vld [vmem:[%s2 + $0x38] sm:$0xff]
  %v61 = vld [vmem:[%s2 + $0x40] sm:$0xff]
  %v62 = vld [vmem:[%s2 + $0x48] sm:$0xff]
  %v63 = vld [vmem:[%s2 + $0x50] sm:$0xff]
  %v64 = vld [vmem:[%s2 + $0x58] sm:$0xff]
  %v65 = vld [vmem:[%s2 + $0x60] sm:$0xff]
  %v66 = vld [vmem:[%s2 + $0x68] sm:$0xff]
  %v67 = vld [vmem:[%s2 + $0x70] sm:$0xff]
  %v68 = vld [vmem:[%s2 + $0x78] sm:$0xff]
  %70 = vset.pattern.permute.xlu0 0
  %71 = vperm.xlu0 %70, %v53
  %v72 = vpop.permute.xlu0 %71
  %75 = vset.pattern.permute.xlu0 0
  %76 = vperm.xlu0 %75, %v54
  %v77 = vpop.permute.xlu0 %76
  %80 = vset.pattern.permute.xlu0 0
  %81 = vperm.xlu0 %80, %v55
  %v82 = vpop.permute.xlu0 %81
  %85 = vset.pattern.permute.xlu0 0
  %86 = vperm.xlu0 %85, %v56
  %v87 = vpop.permute.xlu0 %86
  %90 = vset.pattern.permute.xlu0 0
  %91 = vperm.xlu0 %90, %v57
  %v92 = vpop.permute.xlu0 %91
  %95 = vset.pattern.permute.xlu0 0
  %96 = vperm.xlu0 %95, %v58
  %v97 = vpop.permute.xlu0 %96
  %100 = vset.pattern.permute.xlu0 0
  %101 = vperm.xlu0 %100, %v59
  %v102 = vpop.permute.xlu0 %101
  %105 = vset.pattern.permute.xlu0 0
  %106 = vperm.xlu0 %105, %v60
  %v107 = vpop.permute.xlu0 %106
  %110 = vset.pattern.permute.xlu0 0
  %111 = vperm.xlu0 %110, %v61
  %v112 = vpop.permute.xlu0 %111
  %115 = vset.pattern.permute.xlu0 0
  %116 = vperm.xlu0 %115, %v62
  %v117 = vpop.permute.xlu0 %116
  %120 = vset.pattern.permute.xlu0 0
  %121 = vperm.xlu0 %120, %v63
  %v122 = vpop.permute.xlu0 %121
  %125 = vset.pattern.permute.xlu0 0
  %126 = vperm.xlu0 %125, %v64
  %v127 = vpop.permute.xlu0 %126
  %130 = vset.pattern.permute.xlu0 0
  %131 = vperm.xlu0 %130, %v65
  %v132 = vpop.permute.xlu0 %131
  %135 = vset.pattern.permute.xlu0 0
  %136 = vperm.xlu0 %135, %v66
  %v137 = vpop.permute.xlu0 %136
  %140 = vset.pattern.permute.xlu0 0
  %141 = vperm.xlu0 %140, %v67
  %v142 = vpop.permute.xlu0 %141
  %145 = vset.pattern.permute.xlu0 0
  %146 = vperm.xlu0 %145, %v68
  %v147 = vpop.permute.xlu0 %146
  %v165 = vunpack.c.l.b16 %v29
  %v166 = vunpack.c.l.b16 %v30
  %v167 = vunpack.c.l.b16 %v31
  %v168 = vunpack.c.l.b16 %v32
  %v169 = vunpack.c.l.b16 %v33
  %v170 = vunpack.c.l.b16 %v34
  %v171 = vunpack.c.l.b16 %v35
  %v172 = vunpack.c.l.b16 %v36
  %v173 = vunpack.c.l.b16 %v37
  %v174 = vunpack.c.l.b16 %v38
  %v175 = vunpack.c.l.b16 %v39
  %v176 = vunpack.c.l.b16 %v40
  %v177 = vunpack.c.l.b16 %v41
  %v178 = vunpack.c.l.b16 %v42
  %v179 = vunpack.c.l.b16 %v43
  %v180 = vunpack.c.l.b16 %v44
  %v181 = vpack.c.b16 %v166, %v165
  %v182 = vpack.c.b16 %v168, %v167
  %v183 = vpack.c.b16 %v170, %v169
  %v184 = vpack.c.b16 %v172, %v171
  %v185 = vpack.c.b16 %v174, %v173
  %v186 = vpack.c.b16 %v176, %v175
  %v187 = vpack.c.b16 %v178, %v177
  %v188 = vpack.c.b16 %v180, %v179
  %v197 = vunpack.c.l.b16 %v45
  %v198 = vunpack.c.l.b16 %v46
  %v199 = vunpack.c.l.b16 %v47
  %v200 = vunpack.c.l.b16 %v48
  %v201 = vunpack.c.l.b16 %v49
  %v202 = vunpack.c.l.b16 %v50
  %v203 = vunpack.c.l.b16 %v51
  %v204 = vunpack.c.l.b16 %v52
  %v205 = vpack.c.b16 %v198, %v197
  %v206 = vpack.c.b16 %v200, %v199
  %v207 = vpack.c.b16 %v202, %v201
  %v208 = vpack.c.b16 %v204, %v203
  %vm213 = vcmask 523264
  %v215 = vsel %vm213, %v181, 0
  %v218 = vsel %vm213, %v182, 0
  %v221 = vsel %vm213, %v183, 0
  %v224 = vsel %vm213, %v184, 0
  %v227 = vsel %vm213, %v185, 0
  %v230 = vsel %vm213, %v186, 0
  %v233 = vsel %vm213, %v187, 0
  %v236 = vsel %vm213, %v188, 0
  %238 = vmatprep.subr.bf16.mxu0 0
  %239 = vmatpush1.bf16.msra.mxu0 %v205
  %240 = vmatprep.subr.bf16.mxu0 0
  %241 = vmatpush1.bf16.msra.mxu0 %v206
  %242 = vmatprep.subr.bf16.mxu0 0
  %243 = vmatpush1.bf16.msra.mxu0 %v207
  %244 = vmatprep.subr.bf16.mxu0 0
  %245 = vmatpush1.bf16.msra.mxu0 %v208
  %246 = vmatprep.subr.bf16.mxu0 0
  %247 = vmatpush1.bf16.msra.mxu0 0
  %248 = vmatprep.subr.bf16.mxu0 0
  %249 = vmatpush1.bf16.msra.mxu0 0
  %250 = vmatprep.subr.bf16.mxu0 0
  %251 = vmatpush1.bf16.msra.mxu0 0
  %252 = vmatprep.subr.bf16.mxu0 0
  %253 = vmatpush1.bf16.msra.mxu0 0
  %254 = vmatprep.subr.bf16.mxu0 0
  %255 = vmatpush1.bf16.msra.mxu0 0
  %256 = vmatprep.subr.bf16.mxu0 0
  %257 = vmatpush1.bf16.msra.mxu0 0
  %258 = vmatprep.subr.bf16.mxu0 0
  %259 = vmatpush1.bf16.msra.mxu0 0
  %260 = vmatprep.subr.bf16.mxu0 0
  %261 = vmatpush1.bf16.msra.mxu0 0
  %262 = vmatprep.subr.bf16.mxu0 0
  %263 = vmatpush1.bf16.msra.mxu0 0
  %264 = vmatprep.subr.bf16.mxu0 0
  %265 = vmatpush1.bf16.msra.mxu0 0
  %266 = vmatprep.subr.bf16.mxu0 0
  %267 = vmatpush1.bf16.msra.mxu0 0
  %268 = vmatprep.subr.bf16.mxu0 0
  %269 = vmatpush1.bf16.msra.mxu0 0
  %270 = vmatprep.mubr.bf16.mxu0 0
  %271 = vmatmul.mubr.bf16.gmra.mrb[0].mxu0 %v215
  %v272 = vpop.f32.mrb[0].mxu0
  %v273 = vadd.f32 %v72, %v272
  %v274 = vpop.f32.mrb[0].mxu0
  %v275 = vpop.f32.mrb[0].mxu0
  %v276 = vadd.f32 %v77, %v275
  %v277 = vpop.f32.mrb[0].mxu0
  %278 = vmatprep.mubr.bf16.mxu0 0
  %279 = vmatmul.mubr.bf16.gmra.mrb[0].mxu0 %v218
  %v280 = vpop.f32.mrb[0].mxu0
  %v281 = vadd.f32 %v82, %v280
  %v282 = vpop.f32.mrb[0].mxu0
  %v283 = vpop.f32.mrb[0].mxu0
  %v284 = vadd.f32 %v87, %v283
  %v285 = vpop.f32.mrb[0].mxu0
  %286 = vmatprep.mubr.bf16.mxu0 0
  %287 = vmatmul.mubr.bf16.gmra.mrb[0].mxu0 %v221
  %v288 = vpop.f32.mrb[0].mxu0
  %v289 = vadd.f32 %v92, %v288
  %v290 = vpop.f32.mrb[0].mxu0
  %v291 = vpop.f32.mrb[0].mxu0
  %v292 = vadd.f32 %v97, %v291
  %v293 = vpop.f32.mrb[0].mxu0
  %294 = vmatprep.mubr.bf16.mxu0 0
  %295 = vmatmul.mubr.bf16.gmra.mrb[0].mxu0 %v224
  %v296 = vpop.f32.mrb[0].mxu0
  %v297 = vadd.f32 %v102, %v296
  %v298 = vpop.f32.mrb[0].mxu0
  %v299 = vpop.f32.mrb[0].mxu0
  %v300 = vadd.f32 %v107, %v299
  %v301 = vpop.f32.mrb[0].mxu0
  %302 = vmatprep.mubr.bf16.mxu0 0
  %303 = vmatmul.mubr.bf16.gmra.mrb[0].mxu0 %v227
  %v304 = vpop.f32.mrb[0].mxu0
  %v305 = vadd.f32 %v112, %v304
  %v306 = vpop.f32.mrb[0].mxu0
  %v307 = vpop.f32.mrb[0].mxu0
  %v308 = vadd.f32 %v117, %v307
  %v309 = vpop.f32.mrb[0].mxu0
  %310 = vmatprep.mubr.bf16.mxu0 0
  %311 = vmatmul.mubr.bf16.gmra.mrb[0].mxu0 %v230
  %v312 = vpop.f32.mrb[0].mxu0
  %v313 = vadd.f32 %v122, %v312
  %v314 = vpop.f32.mrb[0].mxu0
  %v315 = vpop.f32.mrb[0].mxu0
  %v316 = vadd.f32 %v127, %v315
  %v317 = vpop.f32.mrb[0].mxu0
  %318 = vmatprep.mubr.bf16.mxu0 0
  %319 = vmatmul.mubr.bf16.gmra.mrb[0].mxu0 %v233
  %v320 = vpop.f32.mrb[0].mxu0
  %v321 = vadd.f32 %v132, %v320
  %v322 = vpop.f32.mrb[0].mxu0
  %v323 = vpop.f32.mrb[0].mxu0
  %v324 = vadd.f32 %v137, %v323
  %v325 = vpop.f32.mrb[0].mxu0
  %326 = vmatprep.mubr.bf16.mxu0 0
  %327 = vmatmul.mubr.bf16.gmra.mrb[0].mxu0 %v236
  %v328 = vpop.f32.mrb[0].mxu0
  %v329 = vadd.f32 %v142, %v328
  %v330 = vpop.f32.mrb[0].mxu0
  %v331 = vpop.f32.mrb[0].mxu0
  %v332 = vadd.f32 %v147, %v331
  %v333 = vpop.f32.mrb[0].mxu0
  %334 = vdwg.mxu0
  %v335 = vmax.f32 %v273, 0.0
  %v336 = vmax.f32 %v276, 0.0
  %v337 = vmax.f32 %v281, 0.0
  %v338 = vmax.f32 %v284, 0.0
  %v339 = vmax.f32 %v289, 0.0
  %v340 = vmax.f32 %v292, 0.0
  %v341 = vmax.f32 %v297, 0.0
  %v342 = vmax.f32 %v300, 0.0
  %v343 = vmax.f32 %v305, 0.0
  %v344 = vmax.f32 %v308, 0.0
  %v345 = vmax.f32 %v313, 0.0
  %v346 = vmax.f32 %v316, 0.0
  %v347 = vmax.f32 %v321, 0.0
  %v348 = vmax.f32 %v324, 0.0
  %v349 = vmax.f32 %v329, 0.0
  %v350 = vmax.f32 %v332, 0.0
  %v351 = vld [vmem:[%s3] sm:$0xf]
  %v352 = vld [vmem:[%s3 + $0x4] sm:$0xf]
  %v353 = vld [vmem:[%s3 + $0x8] sm:$0xf]
  %v354 = vld [vmem:[%s3 + $0xc] sm:$0xf]
  %v355 = vld [vmem:[%s3 + $0x10] sm:$0xf]
  %v356 = vld [vmem:[%s3 + $0x14] sm:$0xf]
  %v357 = vld [vmem:[%s3 + $0x18] sm:$0xf]
  %v358 = vld [vmem:[%s3 + $0x1c] sm:$0xf]
  %v359 = vld [vmem:[%s3 + $0x20] sm:$0xf]
  %v360 = vld [vmem:[%s3 + $0x24] sm:$0xf]
  %v361 = vld [vmem:[%s3 + $0x28] sm:$0xf]
  %v362 = vld [vmem:[%s3 + $0x2c] sm:$0xf]
  %v363 = vld [vmem:[%s3 + $0x30] sm:$0xf]
  %v364 = vld [vmem:[%s3 + $0x34] sm:$0xf]
  %v365 = vld [vmem:[%s3 + $0x38] sm:$0xf]
  %v366 = vld [vmem:[%s3 + $0x3c] sm:$0xf]
  %v367 = vpack.c.bf16 %v336, %v335
  %v368 = vpack.c.bf16 %v338, %v337
  %v369 = vpack.c.bf16 %v340, %v339
  %v370 = vpack.c.bf16 %v342, %v341
  %v371 = vpack.c.bf16 %v344, %v343
  %v372 = vpack.c.bf16 %v346, %v345
  %v373 = vpack.c.bf16 %v348, %v347
  %v374 = vpack.c.bf16 %v350, %v349
  %v375 = vld [vmem:[%s4] sm:$0xff]
  %v376 = vld [vmem:[%s4 + $0x8] sm:$0xff]
  %v377 = vld [vmem:[%s4 + $0x10] sm:$0xff]
  %v378 = vld [vmem:[%s4 + $0x18] sm:$0xff]
  %v379 = vld [vmem:[%s4 + $0x20] sm:$0xff]
  %v380 = vld [vmem:[%s4 + $0x28] sm:$0xff]
  %v381 = vld [vmem:[%s4 + $0x30] sm:$0xff]
  %v382 = vld [vmem:[%s4 + $0x38] sm:$0xff]
  %v383 = vld [vmem:[%s4 + $0x40] sm:$0xff]
  %v384 = vld [vmem:[%s4 + $0x48] sm:$0xff]
  %v385 = vld [vmem:[%s4 + $0x50] sm:$0xff]
  %v386 = vld [vmem:[%s4 + $0x58] sm:$0xff]
  %v387 = vld [vmem:[%s4 + $0x60] sm:$0xff]
  %v388 = vld [vmem:[%s4 + $0x68] sm:$0xff]
  %v389 = vld [vmem:[%s4 + $0x70] sm:$0xff]
  %v390 = vld [vmem:[%s4 + $0x78] sm:$0xff]
  %392 = vset.pattern.permute.xlu0 0
  %393 = vperm.xlu0 %392, %v375
  %v394 = vpop.permute.xlu0 %393
  %397 = vset.pattern.permute.xlu0 0
  %398 = vperm.xlu0 %397, %v376
  %v399 = vpop.permute.xlu0 %398
  %402 = vset.pattern.permute.xlu0 0
  %403 = vperm.xlu0 %402, %v377
  %v404 = vpop.permute.xlu0 %403
  %407 = vset.pattern.permute.xlu0 0
  %408 = vperm.xlu0 %407, %v378
  %v409 = vpop.permute.xlu0 %408
  %412 = vset.pattern.permute.xlu0 0
  %413 = vperm.xlu0 %412, %v379
  %v414 = vpop.permute.xlu0 %413
  %417 = vset.pattern.permute.xlu0 0
  %418 = vperm.xlu0 %417, %v380
  %v419 = vpop.permute.xlu0 %418
  %422 = vset.pattern.permute.xlu0 0
  %423 = vperm.xlu0 %422, %v381
  %v424 = vpop.permute.xlu0 %423
  %427 = vset.pattern.permute.xlu0 0
  %428 = vperm.xlu0 %427, %v382
  %v429 = vpop.permute.xlu0 %428
  %432 = vset.pattern.permute.xlu0 0
  %433 = vperm.xlu0 %432, %v383
  %v434 = vpop.permute.xlu0 %433
  %437 = vset.pattern.permute.xlu0 0
  %438 = vperm.xlu0 %437, %v384
  %v439 = vpop.permute.xlu0 %438
  %442 = vset.pattern.permute.xlu0 0
  %443 = vperm.xlu0 %442, %v385
  %v444 = vpop.permute.xlu0 %443
  %447 = vset.pattern.permute.xlu0 0
  %448 = vperm.xlu0 %447, %v386
  %v449 = vpop.permute.xlu0 %448
  %452 = vset.pattern.permute.xlu0 0
  %453 = vperm.xlu0 %452, %v387
  %v454 = vpop.permute.xlu0 %453
  %457 = vset.pattern.permute.xlu0 0
  %458 = vperm.xlu0 %457, %v388
  %v459 = vpop.permute.xlu0 %458
  %462 = vset.pattern.permute.xlu0 0
  %463 = vperm.xlu0 %462, %v389
  %v464 = vpop.permute.xlu0 %463
  %467 = vset.pattern.permute.xlu0 0
  %468 = vperm.xlu0 %467, %v390
  %v469 = vpop.permute.xlu0 %468
  %v487 = vunpack.c.l.b16 %v351
  %v488 = vunpack.c.l.b16 %v352
  %v489 = vunpack.c.l.b16 %v353
  %v490 = vunpack.c.l.b16 %v354
  %v491 = vunpack.c.l.b16 %v355
  %v492 = vunpack.c.l.b16 %v356
  %v493 = vunpack.c.l.b16 %v357
  %v494 = vunpack.c.l.b16 %v358
  %v495 = vunpack.c.l.b16 %v359
  %v496 = vunpack.c.l.b16 %v360
  %v497 = vunpack.c.l.b16 %v361
  %v498 = vunpack.c.l.b16 %v362
  %v499 = vunpack.c.l.b16 %v363
  %v500 = vunpack.c.l.b16 %v364
  %v501 = vunpack.c.l.b16 %v365
  %v502 = vunpack.c.l.b16 %v366
  %v503 = vpack.c.b16 %v488, %v487
  %v504 = vpack.c.b16 %v490, %v489
  %v505 = vpack.c.b16 %v492, %v491
  %v506 = vpack.c.b16 %v494, %v493
  %v507 = vpack.c.b16 %v496, %v495
  %v508 = vpack.c.b16 %v498, %v497
  %v509 = vpack.c.b16 %v500, %v499
  %v510 = vpack.c.b16 %v502, %v501
  %519 = vmatprep.subr.bf16.mxu0 0
  %520 = vmatpush1.bf16.msra.mxu0 %v367
  %521 = vmatprep.subr.bf16.mxu0 0
  %522 = vmatpush1.bf16.msra.mxu0 %v368
  %523 = vmatprep.subr.bf16.mxu0 0
  %524 = vmatpush1.bf16.msra.mxu0 %v369
  %525 = vmatprep.subr.bf16.mxu0 0
  %526 = vmatpush1.bf16.msra.mxu0 %v370
  %527 = vmatprep.subr.bf16.mxu0 0
  %528 = vmatpush1.bf16.msra.mxu0 %v371
  %529 = vmatprep.subr.bf16.mxu0 0
  %530 = vmatpush1.bf16.msra.mxu0 %v372
  %531 = vmatprep.subr.bf16.mxu0 0
  %532 = vmatpush1.bf16.msra.mxu0 %v373
  %533 = vmatprep.subr.bf16.mxu0 0
  %534 = vmatpush1.bf16.msra.mxu0 %v374
  %535 = vmatprep.subr.bf16.mxu0 0
  %536 = vmatpush1.bf16.msra.mxu0 0
  %537 = vmatprep.subr.bf16.mxu0 0
  %538 = vmatpush1.bf16.msra.mxu0 0
  %539 = vmatprep.subr.bf16.mxu0 0
  %540 = vmatpush1.bf16.msra.mxu0 0
  %541 = vmatprep.subr.bf16.mxu0 0
  %542 = vmatpush1.bf16.msra.mxu0 0
  %543 = vmatprep.subr.bf16.mxu0 0
  %544 = vmatpush1.bf16.msra.mxu0 0
  %545 = vmatprep.subr.bf16.mxu0 0
  %546 = vmatpush1.bf16.msra.mxu0 0
  %547 = vmatprep.subr.bf16.mxu0 0
  %548 = vmatpush1.bf16.msra.mxu0 0
  %549 = vmatprep.subr.bf16.mxu0 0
  %550 = vmatpush1.bf16.msra.mxu0 0
  %551 = vmatprep.mubr.bf16.mxu0 0
  %552 = vmatmul.mubr.bf16.gmra.mrb[0].mxu0 %v503
  %v553 = vpop.f32.mrb[0].mxu0
  %v554 = vadd.f32 %v394, %v553
  %v555 = vpop.f32.mrb[0].mxu0
  %v556 = vpop.f32.mrb[0].mxu0
  %v557 = vadd.f32 %v399, %v556
  %v558 = vpop.f32.mrb[0].mxu0
  %559 = vmatprep.mubr.bf16.mxu0 0
  %560 = vmatmul.mubr.bf16.gmra.mrb[0].mxu0 %v504
  %v561 = vpop.f32.mrb[0].mxu0
  %v562 = vadd.f32 %v404, %v561
  %v563 = vpop.f32.mrb[0].mxu0
  %v564 = vpop.f32.mrb[0].mxu0
  %v565 = vadd.f32 %v409, %v564
  %v566 = vpop.f32.mrb[0].mxu0
  %567 = vmatprep.mubr.bf16.mxu0 0
  %568 = vmatmul.mubr.bf16.gmra.mrb[0].mxu0 %v505
  %v569 = vpop.f32.mrb[0].mxu0
  %v570 = vadd.f32 %v414, %v569
  %v571 = vpop.f32.mrb[0].mxu0
  %v572 = vpop.f32.mrb[0].mxu0
  %v573 = vadd.f32 %v419, %v572
  %v574 = vpop.f32.mrb[0].mxu0
  %575 = vmatprep.mubr.bf16.mxu0 0
  %576 = vmatmul.mubr.bf16.gmra.mrb[0].mxu0 %v506
  %v577 = vpop.f32.mrb[0].mxu0
  %v578 = vadd.f32 %v424, %v577
  %v579 = vpop.f32.mrb[0].mxu0
  %v580 = vpop.f32.mrb[0].mxu0
  %v581 = vadd.f32 %v429, %v580
  %v582 = vpop.f32.mrb[0].mxu0
  %583 = vmatprep.mubr.bf16.mxu0 0
  %584 = vmatmul.mubr.bf16.gmra.mrb[0].mxu0 %v507
  %v585 = vpop.f32.mrb[0].mxu0
  %v586 = vadd.f32 %v434, %v585
  %v587 = vpop.f32.mrb[0].mxu0
  %v588 = vpop.f32.mrb[0].mxu0
  %v589 = vadd.f32 %v439, %v588
  %v590 = vpop.f32.mrb[0].mxu0
  %591 = vmatprep.mubr.bf16.mxu0 0
  %592 = vmatmul.mubr.bf16.gmra.mrb[0].mxu0 %v508
  %v593 = vpop.f32.mrb[0].mxu0
  %v594 = vadd.f32 %v444, %v593
  %v595 = vpop.f32.mrb[0].mxu0
  %v596 = vpop.f32.mrb[0].mxu0
  %v597 = vadd.f32 %v449, %v596
  %v598 = vpop.f32.mrb[0].mxu0
  %599 = vmatprep.mubr.bf16.mxu0 0
  %600 = vmatmul.mubr.bf16.gmra.mrb[0].mxu0 %v509
  %v601 = vpop.f32.mrb[0].mxu0
  %v602 = vadd.f32 %v454, %v601
  %v603 = vpop.f32.mrb[0].mxu0
  %v604 = vpop.f32.mrb[0].mxu0
  %v605 = vadd.f32 %v459, %v604
  %v606 = vpop.f32.mrb[0].mxu0
  %607 = vmatprep.mubr.bf16.mxu0 0
  %608 = vmatmul.mubr.bf16.gmra.mrb[0].mxu0 %v510
  %v609 = vpop.f32.mrb[0].mxu0
  %v610 = vadd.f32 %v464, %v609
  %v611 = vpop.f32.mrb[0].mxu0
  %v612 = vpop.f32.mrb[0].mxu0
  %v613 = vadd.f32 %v469, %v612
  %v614 = vpop.f32.mrb[0].mxu0
  %615 = vdwg.mxu0
  %v616 = vmax.f32 %v554, 0.0
  %v617 = vmax.f32 %v557, 0.0
  %v618 = vmax.f32 %v562, 0.0
  %v619 = vmax.f32 %v565, 0.0
  %v620 = vmax.f32 %v570, 0.0
  %v621 = vmax.f32 %v573, 0.0
  %v622 = vmax.f32 %v578, 0.0
  %v623 = vmax.f32 %v581, 0.0
  %v624 = vmax.f32 %v586, 0.0
  %v625 = vmax.f32 %v589, 0.0
  %v626 = vmax.f32 %v594, 0.0
  %v627 = vmax.f32 %v597, 0.0
  %v628 = vmax.f32 %v602, 0.0
  %v629 = vmax.f32 %v605, 0.0
  %v630 = vmax.f32 %v610, 0.0
  %v631 = vmax.f32 %v613, 0.0
  %v632 = vld [vmem:[%s5] sm:$0xff]
  %v633 = vld [vmem:[%s5 + $0x8] sm:$0xff]
  %v634 = vld [vmem:[%s5 + $0x10] sm:$0xff]
  %v635 = vld [vmem:[%s5 + $0x18] sm:$0xff]
  %v636 = vld [vmem:[%s5 + $0x20] sm:$0xff]
  %v637 = vld [vmem:[%s5 + $0x28] sm:$0xff]
  %v638 = vld [vmem:[%s5 + $0x30] sm:$0xff]
  %v639 = vld [vmem:[%s5 + $0x38] sm:$0xff]
  %v640 = vld [vmem:[%s5 + $0x40] sm:$0xff]
  %v641 = vld [vmem:[%s5 + $0x48] sm:$0xff]
  %v642 = vld [vmem:[%s5 + $0x50] sm:$0xff]
  %v643 = vld [vmem:[%s5 + $0x58] sm:$0xff]
  %v644 = vld [vmem:[%s5 + $0x60] sm:$0xff]
  %v645 = vld [vmem:[%s5 + $0x68] sm:$0xff]
  %v646 = vld [vmem:[%s5 + $0x70] sm:$0xff]
  %v647 = vld [vmem:[%s5 + $0x78] sm:$0xff]
  %649 = vset.pattern.permute.xlu0 0
  %650 = vperm.xlu0 %649, %v632
  %v651 = vpop.permute.xlu0 %650
  %654 = vset.pattern.permute.xlu0 0
  %655 = vperm.xlu0 %654, %v633
  %v656 = vpop.permute.xlu0 %655
  %659 = vset.pattern.permute.xlu0 0
  %660 = vperm.xlu0 %659, %v634
  %v661 = vpop.permute.xlu0 %660
  %664 = vset.pattern.permute.xlu0 0
  %665 = vperm.xlu0 %664, %v635
  %v666 = vpop.permute.xlu0 %665
  %669 = vset.pattern.permute.xlu0 0
  %670 = vperm.xlu0 %669, %v636
  %v671 = vpop.permute.xlu0 %670
  %674 = vset.pattern.permute.xlu0 0
  %675 = vperm.xlu0 %674, %v637
  %v676 = vpop.permute.xlu0 %675
  %679 = vset.pattern.permute.xlu0 0
  %680 = vperm.xlu0 %679, %v638
  %v681 = vpop.permute.xlu0 %680
  %684 = vset.pattern.permute.xlu0 0
  %685 = vperm.xlu0 %684, %v639
  %v686 = vpop.permute.xlu0 %685
  %689 = vset.pattern.permute.xlu0 0
  %690 = vperm.xlu0 %689, %v640
  %v691 = vpop.permute.xlu0 %690
  %694 = vset.pattern.permute.xlu0 0
  %695 = vperm.xlu0 %694, %v641
  %v696 = vpop.permute.xlu0 %695
  %699 = vset.pattern.permute.xlu0 0
  %700 = vperm.xlu0 %699, %v642
  %v701 = vpop.permute.xlu0 %700
  %704 = vset.pattern.permute.xlu0 0
  %705 = vperm.xlu0 %704, %v643
  %v706 = vpop.permute.xlu0 %705
  %709 = vset.pattern.permute.xlu0 0
  %710 = vperm.xlu0 %709, %v644
  %v711 = vpop.permute.xlu0 %710
  %714 = vset.pattern.permute.xlu0 0
  %715 = vperm.xlu0 %714, %v645
  %v716 = vpop.permute.xlu0 %715
  %719 = vset.pattern.permute.xlu0 0
  %720 = vperm.xlu0 %719, %v646
  %v721 = vpop.permute.xlu0 %720
  %724 = vset.pattern.permute.xlu0 0
  %725 = vperm.xlu0 %724, %v647
  %v726 = vpop.permute.xlu0 %725
  %v728 = vmul.f32 %v616, %v651
  %v729 = vmul.f32 %v617, %v656
  %v730 = vmul.f32 %v618, %v661
  %v731 = vmul.f32 %v619, %v666
  %v732 = vmul.f32 %v620, %v671
  %v733 = vmul.f32 %v621, %v676
  %v734 = vmul.f32 %v622, %v681
  %v735 = vmul.f32 %v623, %v686
  %v736 = vmul.f32 %v624, %v691
  %v737 = vmul.f32 %v625, %v696
  %v738 = vmul.f32 %v626, %v701
  %v739 = vmul.f32 %v627, %v706
  %v740 = vmul.f32 %v628, %v711
  %v741 = vmul.f32 %v629, %v716
  %v742 = vmul.f32 %v630, %v721
  %v743 = vmul.f32 %v631, %v726
  %v744 = vadd.f32 %v728, %v729
  %v745 = vadd.f32 %v744, %v730
  %v746 = vadd.f32 %v745, %v731
  %v747 = vadd.f32 %v746, %v732
  %v748 = vadd.f32 %v747, %v733
  %v749 = vadd.f32 %v748, %v734
  %v750 = vadd.f32 %v749, %v735
  %v751 = vadd.f32 %v750, %v736
  %v752 = vadd.f32 %v751, %v737
  %v753 = vadd.f32 %v752, %v738
  %v754 = vadd.f32 %v753, %v739
  %v755 = vadd.f32 %v754, %v740
  %v756 = vadd.f32 %v755, %v741
  %v757 = vadd.f32 %v756, %v742
  %v758 = vadd.f32 %v757, %v743
  %v759 = vrot.slane %v758, 4
  %v760 = vadd.f32 %v758, %v759
  %v761 = vrot.slane %v760, 2
  %v762 = vadd.f32 %v760, %v761
  %v763 = vrot.slane %v762, 1
  %v764 = vadd.f32 %v762, %v763
  %v765 = vld [vmem:[#allocation2] sm:$0x1]
  %767 = vset.pattern.permute.xlu0 0
  %768 = vperm.xlu0 %767, %v765
  %v769 = vpop.permute.xlu0 %768
  %v771 = vlaneseq
  %v772 = vshrl.u32 %v771, 7
  %v773 = vsub.s32 0, %v772
  %v774 = vrot.slane %v769, %v773
  %v775 = vadd.f32 %v764, %v774
  %776 = vst [vmem:[%s7] sm:$0x1] %v775
  // Predicated region
  $region30: #{centralv_mlp.1} parent=0 // pred_check
    _
  $region31: #{centralv_mlp.1} parent=0 // pred_check_branch
    %778 = sbr.rel (0) target = $region33
  $region32: #{centralv_mlp.1} parent=0 // pred_region
    _
  $region33: #{centralv_mlp.1} parent=0 // pred_fallthru
    _
  // Predicated region
  $region34: #{centralv_mlp.1} parent=0 // pred_check
    _
  $region35: #{centralv_mlp.1} parent=0 // pred_check_branch
    %780 = sbr.rel (0) target = $region37
  $region36: #{centralv_mlp.1} parent=0 // pred_region
    _
  $region37: #{centralv_mlp.1} parent=0 // pred_fallthru
    _

</llo_original>
